<compile_context>
chip_gen: v6e
topology: v6e:2x2x1
jax: 0.10.0
libtpu: 0.0.40
codegen_flags: <defaults>
</compile_context>

<pallas_src>
import functools

import jax
import jax.numpy as jnp
import numpy as np
from jax.experimental import pallas as pl
from jax.experimental.pallas import tpu as pltpu  # noqa: F401  (TPU backend assumed)

LN_EPS = 1e-5  # PyTorch nn.LayerNorm default


def _gelu_exact(x):
    # nn.GELU() default: exact erf formulation.
    return 0.5 * x * (1.0 + jax.lax.erf(x * 0.7071067811865476))


def projection_kernel(x_ref, wimg_ref, gamma_ref, beta_ref,
                      w1_ref, b1_ref, w2_ref, b2_ref,
                      a_ref, pm_ref, binc_ref, out_ref, *, pack, inv_d):
    f32 = jnp.float32
    bf16 = jnp.bfloat16

    # image_projection: Linear(C -> D, bias=False).  bf16 operands, f32 accumulate.
    y = jnp.dot(x_ref[...], wimg_ref[...], preferred_element_type=f32)      # (N, D) f32

    # pre_norm: LayerNorm over D, fused single-pass statistics (f32).
    s1 = jnp.sum(y, axis=-1, keepdims=True)
    s2 = jnp.sum(y * y, axis=-1, keepdims=True)
    mean = s1 * inv_d
    var = s2 * inv_d - mean * mean
    ln = (y - mean) * jax.lax.rsqrt(var + LN_EPS)
    ln = ln * gamma_ref[...] + beta_ref[...]                                 # (N, D) f32

    # proj: Linear -> GELU(exact) -> Linear   (bf16 matmuls, f32 elementwise).
    h = jnp.dot(ln.astype(bf16), w1_ref[...], preferred_element_type=f32) + b1_ref[...]
    g = _gelu_exact(h)
    xnew = jnp.dot(g.astype(bf16), w2_ref[...], preferred_element_type=f32) + b2_ref[...]

    # Residual is added to the LayerNorm output (matches the PyTorch module).
    res = (ln + xnew).astype(bf16)                                           # (N, D)

    # increase_dim along the sequence axis, batch folded via block-diagonal winc.
    # `pack` interleaved row groups are routed into disjoint 128-lane slots with
    # exact placement matmuls so the final store is lane-dense.
    acc = binc_ref[...]                                                      # (rows, pack*D) f32
    for i in range(pack):
        t = jnp.dot(a_ref[i], res, preferred_element_type=f32)               # (rows, D) f32
        if pack == 1:
            acc = acc + t
        else:
            acc = acc + jnp.dot(t, pm_ref[i], preferred_element_type=f32)
    out_ref[...] = acc


def projection_model(x, params):
    B, L, C = x.shape
    D = params["wimg"].shape[0]
    E, L2 = params["winc"].shape
    assert L2 == L
    N = B * L
    LANES = 128
    f32, bf16 = jnp.float32, jnp.bfloat16

    # ---- one-time wrapper-side prep (outside the kernel) -------------------
    xf = x.reshape(N, C).astype(bf16)                                # fold batch, bf16 MXU operand
    wimg_t = jnp.asarray(params["wimg"], f32).T.astype(bf16)         # (C, D)
    w1_t = jnp.asarray(params["w1"], f32).T.astype(bf16)             # (D, D)
    w2_t = jnp.asarray(params["w2"], f32).T.astype(bf16)             # (D, D)
    gamma = jnp.asarray(params["gamma"], f32).reshape(1, D)
    beta = jnp.asarray(params["beta"], f32).reshape(1, D)
    b1 = jnp.asarray(params["b1"], f32).reshape(1, D)
    b2 = jnp.asarray(params["b2"], f32).reshape(1, D)
    winc = jnp.asarray(params["winc"], f32)                          # (E, L)
    binc = jnp.asarray(params["binc"], f32).reshape(E)

    # Block-diagonal increase_dim weight over the folded batch: out = winc_blk @ res.
    winc_blk = jnp.kron(jnp.eye(B, dtype=f32), winc)                 # (B*E, B*L)
    binc_full = jnp.broadcast_to(jnp.tile(binc, B)[:, None], (B * E, D))

    # Lane-dense output packing factor.
    if D < LANES and LANES % D == 0 and (B * E) % (LANES // D) == 0:
        pack = LANES // D
    else:
        pack = 1
    rows = (B * E) // pack

    # a_stack[i] holds output rows i, i+pack, i+2*pack, ... of winc_blk.
    a_stack = jnp.stack([winc_blk[i::pack] for i in range(pack)]).astype(bf16)   # (pack, rows, B*L)
    eye_d = jnp.eye(D, dtype=f32)
    pm_stack = jnp.stack(
        [jnp.pad(eye_d, ((0, 0), (i * D, (pack - 1 - i) * D))) for i in range(pack)]
    )                                                                           # (pack, D, pack*D)
    binc_packed = binc_full.reshape(rows, pack * D)                             # (rows, pack*D)

    kernel = functools.partial(projection_kernel, pack=pack, inv_d=1.0 / D)

    # Single kernel step, whole arrays resident in VMEM (tiny at these sizes).
    out_packed = pl.pallas_call(
        kernel,
        out_shape=jax.ShapeDtypeStruct((rows, pack * D), f32),
    )(xf, wimg_t, gamma, beta, w1_t, b1, w2_t, b2, a_stack, pm_stack, binc_packed)

    # Undo the lane packing (row-major order is preserved) -- free XLA reshape.
    return out_packed.reshape(B, E, D)
    # TODO(synk): at production CLIP dims (C~768, D~3072) add a K/N-tiled grid with a
    # pl.when-gated f32 accumulator so weights fit v7x's 64 MiB VMEM.


def reference_forward(x, p, match_kernel_precision=True):
    """Pure-JAX reference mirroring the PyTorch module.

    If match_kernel_precision, matmul operands are cast to bf16 (f32 accumulation)
    exactly as in the kernel, so the comparison isolates kernel bugs from
    quantization effects.
    """
    bf = jnp.bfloat16 if match_kernel_precision else jnp.float32
    f32 = jnp.float32
    y = jnp.einsum("blc,dc->bld", x.astype(bf), p["wimg"].astype(bf),
                   preferred_element_type=f32)                       # image_projection
    mean = y.mean(-1, keepdims=True)
    var = ((y - mean) ** 2).mean(-1, keepdims=True)
    ln = (y - mean) / jnp.sqrt(var + LN_EPS) * p["gamma"] + p["beta"]  # pre_norm
    h = jnp.einsum("bld,ed->ble", ln.astype(bf), p["w1"].astype(bf),
                   preferred_element_type=f32) + p["b1"]
    g = jax.nn.gelu(h, approximate=False)
    xnew = jnp.einsum("ble,de->bld", g.astype(bf), p["w2"].astype(bf),
                      preferred_element_type=f32) + p["b2"]
    res = ln + xnew
    out = jnp.einsum("el,bld->bed", p["winc"].astype(bf), res.astype(bf),
                     preferred_element_type=f32) + p["binc"][None, :, None]
    return out


def make_params(key, c, d, l, e):
    ks = jax.random.split(key, 9)
    s = 0.05
    return {
        "wimg":  jax.random.normal(ks[0], (d, c), jnp.float32) * s,
        "gamma": 1.0 + 0.1 * jax.random.normal(ks[1], (d,), jnp.float32),
        "beta":  0.1 * jax.random.normal(ks[2], (d,), jnp.float32),
        "w1":    jax.random.normal(ks[3], (d, d), jnp.float32) * s,
        "b1":    0.1 * jax.random.normal(ks[4], (d,), jnp.float32),
        "w2":    jax.random.normal(ks[5], (d, d), jnp.float32) * s,
        "b2":    0.1 * jax.random.normal(ks[6], (d,), jnp.float32),
        "winc":  jax.random.normal(ks[7], (e, l), jnp.float32) * s,
        "binc":  0.1 * jax.random.normal(ks[8], (e,), jnp.float32),
    }


if __name__ == "__main__":
    # Small shapes consistent with the module:
    #   input_dim_CLIP=32, input_dim_phi2=64, orig_embed_length=8, embed_length=16
    B, L, C, D, E = 2, 8, 32, 64, 16

    key = jax.random.PRNGKey(0)
    k_x, k_p = jax.random.split(key)
    x = jax.random.normal(k_x, (B, L, C), jnp.float32)
    params = make_params(k_p, C, D, L, E)

    out = jax.block_until_ready(projection_model(x, params))
    assert out.shape == (B, E, D), out.shape

    # Tight check against a precision-matched (bf16-operand) reference.
    ref_bf = jax.block_until_ready(reference_forward(x, params, match_kernel_precision=True))
    np.testing.assert_allclose(np.asarray(out), np.asarray(ref_bf), rtol=1e-3, atol=1e-3)

    # Loose fidelity check against the full-f32 module semantics.
    ref_f32 = jax.block_until_ready(reference_forward(x, params, match_kernel_precision=False))
    np.testing.assert_allclose(np.asarray(out), np.asarray(ref_f32), rtol=5e-2, atol=5e-2)

    print("KERNEL_OK")
</pallas_src>

<mosaic_0001>
module attributes {stable_mosaic.version = 11 : i64} {
  func.func @projection_kernel(%arg0: memref<16x32xbf16, #tpu.memory_space<vmem>>, %arg1: memref<32x64xbf16, #tpu.memory_space<vmem>>, %arg2: memref<1x64xf32, #tpu.memory_space<vmem>>, %arg3: memref<1x64xf32, #tpu.memory_space<vmem>>, %arg4: memref<64x64xbf16, #tpu.memory_space<vmem>>, %arg5: memref<1x64xf32, #tpu.memory_space<vmem>>, %arg6: memref<64x64xbf16, #tpu.memory_space<vmem>>, %arg7: memref<1x64xf32, #tpu.memory_space<vmem>>, %arg8: memref<2x16x16xbf16, #tpu.memory_space<vmem>>, %arg9: memref<2x64x128xf32, #tpu.memory_space<vmem>>, %arg10: memref<16x128xf32, #tpu.memory_space<vmem>>, %arg11: memref<16x128xf32, #tpu.memory_space<vmem>>) attributes {dimension_semantics = [], scalar_prefetch = 0 : i64, scratch_operands = 0 : i64, tpu.core_type = #tpu.core_type<tc>} {
    %c0 = arith.constant 0 : index
    %c0_0 = arith.constant 0 : index
    %0 = vector.load %arg0[%c0, %c0_0] : memref<16x32xbf16, #tpu.memory_space<vmem>>, vector<16x32xbf16>
    %c0_1 = arith.constant 0 : index
    %c0_2 = arith.constant 0 : index
    %1 = vector.load %arg1[%c0_1, %c0_2] : memref<32x64xbf16, #tpu.memory_space<vmem>>, vector<32x64xbf16>
    %cst = arith.constant dense<0.000000e+00> : vector<16x64xf32>
    %2 = tpu.matmul %0, %1, %cst {dimension_numbers = #tpu.dot_dimension_numbers<[1], [0], [0], [1], [0, 0, 1, 1], [], []>} : vector<16x32xbf16>, vector<32x64xbf16>, vector<16x64xf32> -> vector<16x64xf32>
    %cst_3 = arith.constant dense<0.000000e+00> : vector<16xf32>
    %3 = vector.multi_reduction <add>, %2, %cst_3 [1] : vector<16x64xf32> to vector<16xf32>
    %4 = vector.shape_cast %3 : vector<16xf32> to vector<16x1xf32>
    %5 = arith.mulf %2, %2 : vector<16x64xf32>
    %cst_4 = arith.constant dense<0.000000e+00> : vector<16xf32>
    %6 = vector.multi_reduction <add>, %5, %cst_4 [1] : vector<16x64xf32> to vector<16xf32>
    %7 = vector.shape_cast %6 : vector<16xf32> to vector<16x1xf32>
    %cst_5 = arith.constant 1.562500e-02 : f32
    %8 = vector.broadcast %cst_5 : f32 to vector<16x1xf32>
    %9 = arith.mulf %4, %8 : vector<16x1xf32>
    %cst_6 = arith.constant 1.562500e-02 : f32
    %10 = vector.broadcast %cst_6 : f32 to vector<16x1xf32>
    %11 = arith.mulf %7, %10 : vector<16x1xf32>
    %12 = arith.mulf %9, %9 : vector<16x1xf32>
    %13 = arith.subf %11, %12 : vector<16x1xf32>
    %14 = vector.broadcast %9 : vector<16x1xf32> to vector<16x64xf32>
    %15 = arith.subf %2, %14 : vector<16x64xf32>
    %cst_7 = arith.constant 9.99999974E-6 : f32
    %16 = vector.broadcast %cst_7 : f32 to vector<16x1xf32>
    %17 = arith.addf %13, %16 : vector<16x1xf32>
    %18 = math.rsqrt %17 : vector<16x1xf32>
    %19 = vector.broadcast %18 : vector<16x1xf32> to vector<16x64xf32>
    %20 = arith.mulf %15, %19 : vector<16x64xf32>
    %c0_8 = arith.constant 0 : index
    %c0_9 = arith.constant 0 : index
    %21 = vector.load %arg2[%c0_8, %c0_9] : memref<1x64xf32, #tpu.memory_space<vmem>>, vector<1x64xf32>
    %22 = vector.broadcast %21 : vector<1x64xf32> to vector<16x64xf32>
    %23 = arith.mulf %20, %22 : vector<16x64xf32>
    %c0_10 = arith.constant 0 : index
    %c0_11 = arith.constant 0 : index
    %24 = vector.load %arg3[%c0_10, %c0_11] : memref<1x64xf32, #tpu.memory_space<vmem>>, vector<1x64xf32>
    %25 = vector.broadcast %24 : vector<1x64xf32> to vector<16x64xf32>
    %26 = arith.addf %23, %25 : vector<16x64xf32>
    %27 = arith.truncf %26 : vector<16x64xf32> to vector<16x64xbf16>
    %c0_12 = arith.constant 0 : index
    %c0_13 = arith.constant 0 : index
    %28 = vector.load %arg4[%c0_12, %c0_13] : memref<64x64xbf16, #tpu.memory_space<vmem>>, vector<64x64xbf16>
    %cst_14 = arith.constant dense<0.000000e+00> : vector<16x64xf32>
    %29 = tpu.matmul %27, %28, %cst_14 {dimension_numbers = #tpu.dot_dimension_numbers<[1], [0], [0], [1], [0, 0, 1, 1], [], []>} : vector<16x64xbf16>, vector<64x64xbf16>, vector<16x64xf32> -> vector<16x64xf32>
    %c0_15 = arith.constant 0 : index
    %c0_16 = arith.constant 0 : index
    %30 = vector.load %arg5[%c0_15, %c0_16] : memref<1x64xf32, #tpu.memory_space<vmem>>, vector<1x64xf32>
    %31 = vector.broadcast %30 : vector<1x64xf32> to vector<16x64xf32>
    %32 = arith.addf %29, %31 : vector<16x64xf32>
    %cst_17 = arith.constant 5.000000e-01 : f32
    %33 = vector.broadcast %cst_17 : f32 to vector<16x64xf32>
    %34 = arith.mulf %33, %32 : vector<16x64xf32>
    %cst_18 = arith.constant 0.707106769 : f32
    %35 = vector.broadcast %cst_18 : f32 to vector<16x64xf32>
    %36 = arith.mulf %32, %35 : vector<16x64xf32>
    %37 = math.erf %36 : vector<16x64xf32>
    %cst_19 = arith.constant 1.000000e+00 : f32
    %38 = vector.broadcast %cst_19 : f32 to vector<16x64xf32>
    %39 = arith.addf %38, %37 : vector<16x64xf32>
    %40 = arith.mulf %34, %39 : vector<16x64xf32>
    %41 = arith.truncf %40 : vector<16x64xf32> to vector<16x64xbf16>
    %c0_20 = arith.constant 0 : index
    %c0_21 = arith.constant 0 : index
    %42 = vector.load %arg6[%c0_20, %c0_21] : memref<64x64xbf16, #tpu.memory_space<vmem>>, vector<64x64xbf16>
    %cst_22 = arith.constant dense<0.000000e+00> : vector<16x64xf32>
    %43 = tpu.matmul %41, %42, %cst_22 {dimension_numbers = #tpu.dot_dimension_numbers<[1], [0], [0], [1], [0, 0, 1, 1], [], []>} : vector<16x64xbf16>, vector<64x64xbf16>, vector<16x64xf32> -> vector<16x64xf32>
    %c0_23 = arith.constant 0 : index
    %c0_24 = arith.constant 0 : index
    %44 = vector.load %arg7[%c0_23, %c0_24] : memref<1x64xf32, #tpu.memory_space<vmem>>, vector<1x64xf32>
    %45 = vector.broadcast %44 : vector<1x64xf32> to vector<16x64xf32>
    %46 = arith.addf %43, %45 : vector<16x64xf32>
    %47 = arith.addf %26, %46 : vector<16x64xf32>
    %48 = arith.truncf %47 : vector<16x64xf32> to vector<16x64xbf16>
    %c0_25 = arith.constant 0 : index
    %c0_26 = arith.constant 0 : index
    %49 = vector.load %arg10[%c0_25, %c0_26] : memref<16x128xf32, #tpu.memory_space<vmem>>, vector<16x128xf32>
    %c0_27 = arith.constant 0 : index
    %c0_28 = arith.constant 0 : index
    %c0_29 = arith.constant 0 : index
    %50 = vector.load %arg8[%c0_27, %c0_28, %c0_29] : memref<2x16x16xbf16, #tpu.memory_space<vmem>>, vector<1x16x16xbf16>
    %51 = vector.shape_cast %50 : vector<1x16x16xbf16> to vector<16x16xbf16>
    %cst_30 = arith.constant dense<0.000000e+00> : vector<16x64xf32>
    %52 = tpu.matmul %51, %48, %cst_30 {dimension_numbers = #tpu.dot_dimension_numbers<[1], [0], [0], [1], [0, 0, 1, 1], [], []>} : vector<16x16xbf16>, vector<16x64xbf16>, vector<16x64xf32> -> vector<16x64xf32>
    %c0_31 = arith.constant 0 : index
    %c0_32 = arith.constant 0 : index
    %c0_33 = arith.constant 0 : index
    %53 = vector.load %arg9[%c0_31, %c0_32, %c0_33] : memref<2x64x128xf32, #tpu.memory_space<vmem>>, vector<1x64x128xf32>
    %54 = vector.shape_cast %53 : vector<1x64x128xf32> to vector<64x128xf32>
    %cst_34 = arith.constant dense<0.000000e+00> : vector<16x128xf32>
    %55 = tpu.matmul %52, %54, %cst_34 {dimension_numbers = #tpu.dot_dimension_numbers<[1], [0], [0], [1], [0, 0, 1, 1], [], []>} : vector<16x64xf32>, vector<64x128xf32>, vector<16x128xf32> -> vector<16x128xf32>
    %56 = arith.addf %49, %55 : vector<16x128xf32>
    %c1 = arith.constant 1 : index
    %c0_35 = arith.constant 0 : index
    %c0_36 = arith.constant 0 : index
    %57 = vector.load %arg8[%c1, %c0_35, %c0_36] : memref<2x16x16xbf16, #tpu.memory_space<vmem>>, vector<1x16x16xbf16>
    %58 = vector.shape_cast %57 : vector<1x16x16xbf16> to vector<16x16xbf16>
    %cst_37 = arith.constant dense<0.000000e+00> : vector<16x64xf32>
    %59 = tpu.matmul %58, %48, %cst_37 {dimension_numbers = #tpu.dot_dimension_numbers<[1], [0], [0], [1], [0, 0, 1, 1], [], []>} : vector<16x16xbf16>, vector<16x64xbf16>, vector<16x64xf32> -> vector<16x64xf32>
    %c1_38 = arith.constant 1 : index
    %c0_39 = arith.constant 0 : index
    %c0_40 = arith.constant 0 : index
    %60 = vector.load %arg9[%c1_38, %c0_39, %c0_40] : memref<2x64x128xf32, #tpu.memory_space<vmem>>, vector<1x64x128xf32>
    %61 = vector.shape_cast %60 : vector<1x64x128xf32> to vector<64x128xf32>
    %cst_41 = arith.constant dense<0.000000e+00> : vector<16x128xf32>
    %62 = tpu.matmul %59, %61, %cst_41 {dimension_numbers = #tpu.dot_dimension_numbers<[1], [0], [0], [1], [0, 0, 1, 1], [], []>} : vector<16x64xf32>, vector<64x128xf32>, vector<16x128xf32> -> vector<16x128xf32>
    %63 = arith.addf %56, %62 : vector<16x128xf32>
    %c0_42 = arith.constant 0 : index
    %c0_43 = arith.constant 0 : index
    %64 = vector.load %arg11[%c0_42, %c0_43] : memref<16x128xf32, #tpu.memory_space<vmem>>, vector<16x128xf32>
    tpu.vector_store %arg11[%c0_42, %c0_43], %63 {strides = array<i32>} : memref<16x128xf32, #tpu.memory_space<vmem>>, vector<16x128xf32>,
    return
  }
}

</mosaic_0001>

<llo_original>
// kernel: tpu_custom_call.1
$region0: #{tpu_custom_call.1}
  #allocation0 [shape = 'u32[]', space=smem, size = 0x4, offset = 0x4, fixed_abs, tag = 'smem constant byte address 0x4 - core index']
  #allocation1 [shape = 'u32[144,128]{1,0:T(1,128)}', space=vmem, size = 0x12000, scoped, tag = 'internal scratch']
  %s0 = inlined_call_operand.hbm [shape: bf16[16,32], index: 0, kind: input, shape index: {}]
  %s1 = inlined_call_operand.hbm [shape: bf16[32,64], index: 1, kind: input, shape index: {}]
  %s2 = inlined_call_operand.vmem [shape: f32[1,64], index: 2, kind: input, shape index: {}]
  %s3 = inlined_call_operand.vmem [shape: f32[1,64], index: 3, kind: input, shape index: {}]
  %s4 = inlined_call_operand.hbm [shape: bf16[64,64], index: 4, kind: input, shape index: {}]
  %s5 = inlined_call_operand.hbm [shape: f32[1,64], index: 5, kind: input, shape index: {}]
  %s6 = inlined_call_operand.hbm [shape: bf16[64,64], index: 6, kind: input, shape index: {}]
  %s7 = inlined_call_operand.hbm [shape: f32[1,64], index: 7, kind: input, shape index: {}]
  %s8 = inlined_call_operand.hbm [shape: bf16[2,16,16], index: 8, kind: input, shape index: {}]
  %s9 = inlined_call_operand.hbm [shape: f32[2,64,128], index: 9, kind: input, shape index: {}]
  %s10 = inlined_call_operand.vmem [shape: f32[16,128], index: 10, kind: input, shape index: {}]
  %s11 = inlined_call_operand.hbm [shape: f32[16,128], index: 11, kind: output, shape index: {}]
  %s12 = sld [smem:[#allocation0]]
  $region86: #{tpu_custom_call.1} parent=0
    _
  %s14 = ssub.s32 1, %s12
  %s15 = scalar_select 0, %s14, %s12
  $region1: #{tpu_custom_call.1} parent=0
    #allocation2 [shape = 'u8[4096]{0}', space=vmem, size = 0x1000, scoped, tag = 'input window, operand 0, single buffered']
    #allocation3 [shape = 's32[1]{0}', space=sflag, size = 0x4, scoped, tag = 'scoped memory for tpu_custom_call.1']
    #allocation4 [shape = 's32[1]{0}', space=sflag, size = 0x4, scoped, tag = 'scoped memory for tpu_custom_call.1']
    #allocation5 [shape = 'u8[8192]{0}', space=vmem, size = 0x2000, scoped, tag = 'input window, operand 1, single buffered']
    #allocation6 [shape = 's32[1]{0}', space=sflag, size = 0x4, scoped, tag = 'scoped memory for tpu_custom_call.1']
    #allocation7 [shape = 'u8[16384]{0}', space=vmem, size = 0x4000, scoped, tag = 'input window, operand 4, single buffered']
    #allocation8 [shape = 'u8[512]{0}', space=vmem, size = 0x400, scoped, tag = 'input window, operand 5, single buffered']
    #allocation9 [shape = 's32[1]{0}', space=sflag, size = 0x4, scoped, tag = 'scoped memory for tpu_custom_call.1']
    #allocation10 [shape = 'u8[16384]{0}', space=vmem, size = 0x4000, scoped, tag = 'input window, operand 6, single buffered']
    #allocation11 [shape = 'u8[512]{0}', space=vmem, size = 0x400, scoped, tag = 'input window, operand 7, single buffered']
    #allocation12 [shape = 's32[1]{0}', space=sflag, size = 0x4, scoped, tag = 'scoped memory for tpu_custom_call.1']
    #allocation13 [shape = 'u8[8192]{0}', space=vmem, size = 0x2000, scoped, tag = 'input window, operand 8, single buffered']
    #allocation14 [shape = 'u8[65536]{0}', space=vmem, size = 0x10000, scoped, tag = 'input window, operand 9, single buffered']
    #allocation15 [shape = 's32[1]{0}', space=sflag, size = 0x4, scoped, tag = 'scoped memory for tpu_custom_call.1']
    #allocation16 [shape = 'u8[8192]{0}', space=vmem, size = 0x2000, scoped, tag = 'output window, operand 0, single buffered']
    %16 = vsyncpa [#allocation3], 0
    %17 = vsyncpa [#allocation6], 0
    %18 = vsyncpa [#allocation9], 0
    %19 = vsyncpa [#allocation12], 0
    %20 = vsyncpa [#allocation15], 0
    %21 = vsyncpa [#allocation4], 0
    // Predicated region
    $region2: #{tpu_custom_call.1} parent=1 // pred_check
      _
    $region3: #{tpu_custom_call.1} parent=1 // pred_check_branch
      %23 = sbr.rel (0) target = $region5
    $region4: #{tpu_custom_call.1} parent=1 // pred_region
      %s25 = ssub.s32 128, 128
      %26 = vsyncadd [#allocation3], %s25
      %s27 = sshll.u32 [#allocation2], 4
      %s28 = int_to_ptr.vmem [resolvable:$true] %s27
      %33 = dma.hbm_to_vmem [thread:$0]  %s0, 128, %s28, [#allocation3], 64, 64, 4
    $region5: #{tpu_custom_call.1} parent=1 // pred_fallthru
      _
    // Predicated region
    $region6: #{tpu_custom_call.1} parent=1 // pred_check
      _
    $region7: #{tpu_custom_call.1} parent=1 // pred_check_branch
      %35 = sbr.rel (0) target = $region9
    $region8: #{tpu_custom_call.1} parent=1 // pred_region
      %s37 = ssub.s32 256, 256
      %38 = vsyncadd [#allocation6], %s37
      %s39 = sshll.u32 [#allocation5], 4
      %s40 = int_to_ptr.vmem [resolvable:$true] %s39
      %45 = dma.hbm_to_vmem [thread:$0]  %s1, 256, %s40, [#allocation6], 64, 64, 4
    $region9: #{tpu_custom_call.1} parent=1 // pred_fallthru
      _
    // Predicated region
    $region10: #{tpu_custom_call.1} parent=1 // pred_check
      _
    $region11: #{tpu_custom_call.1} parent=1 // pred_check_branch
      %47 = sbr.rel (0) target = $region13
    $region12: #{tpu_custom_call.1} parent=1 // pred_region
      _
    $region13: #{tpu_custom_call.1} parent=1 // pred_fallthru
      _
    // Predicated region
    $region14: #{tpu_custom_call.1} parent=1 // pred_check
      _
    $region15: #{tpu_custom_call.1} parent=1 // pred_check_branch
      %49 = sbr.rel (0) target = $region17
    $region16: #{tpu_custom_call.1} parent=1 // pred_region
      _
    $region17: #{tpu_custom_call.1} parent=1 // pred_fallthru
      _
    // Predicated region
    $region18: #{tpu_custom_call.1} parent=1 // pred_check
      _
    $region19: #{tpu_custom_call.1} parent=1 // pred_check_branch
      %51 = sbr.rel (0) target = $region21
    $region20: #{tpu_custom_call.1} parent=1 // pred_region
      %s53 = ssub.s32 512, 512
      %54 = vsyncadd [#allocation6], %s53
      %s55 = sshll.u32 [#allocation7], 4
      %s56 = int_to_ptr.vmem [resolvable:$true] %s55
      %61 = dma.hbm_to_vmem [thread:$0]  %s4, 512, %s56, [#allocation6], 64, 64, 4
    $region21: #{tpu_custom_call.1} parent=1 // pred_fallthru
      _
    // Predicated region
    $region22: #{tpu_custom_call.1} parent=1 // pred_check
      _
    $region23: #{tpu_custom_call.1} parent=1 // pred_check_branch
      %63 = sbr.rel (0) target = $region25
    $region24: #{tpu_custom_call.1} parent=1 // pred_region
      %s65 = ssub.s32 16, 16
      %66 = vsyncadd [#allocation9], %s65
      %s68 = sshll.u32 [#allocation8], 4
      %s69 = int_to_ptr.vmem [resolvable:$true] %s68
      %71 = dma.hbm_to_vmem [thread:$0]  %s5, 16, %s69, [#allocation9]
    $region25: #{tpu_custom_call.1} parent=1 // pred_fallthru
      _
    // Predicated region
    $region26: #{tpu_custom_call.1} parent=1 // pred_check
      _
    $region27: #{tpu_custom_call.1} parent=1 // pred_check_branch
      %73 = sbr.rel (0) target = $region29
    $region28: #{tpu_custom_call.1} parent=1 // pred_region
      %s75 = ssub.s32 512, 512
      %76 = vsyncadd [#allocation9], %s75
      %s77 = sshll.u32 [#allocation10], 4
      %s78 = int_to_ptr.vmem [resolvable:$true] %s77
      %83 = dma.hbm_to_vmem [thread:$0]  %s6, 512, %s78, [#allocation9], 64, 64, 4
    $region29: #{tpu_custom_call.1} parent=1 // pred_fallthru
      _
    // Predicated region
    $region30: #{tpu_custom_call.1} parent=1 // pred_check
      _
    $region31: #{tpu_custom_call.1} parent=1 // pred_check_branch
      %85 = sbr.rel (0) target = $region33
    $region32: #{tpu_custom_call.1} parent=1 // pred_region
      %s87 = ssub.s32 16, 16
      %88 = vsyncadd [#allocation12], %s87
      %s90 = sshll.u32 [#allocation11], 4
      %s91 = int_to_ptr.vmem [resolvable:$true] %s90
      %93 = dma.hbm_to_vmem [thread:$0]  %s7, 16, %s91, [#allocation12]
    $region33: #{tpu_custom_call.1} parent=1 // pred_fallthru
      _
    // Predicated region
    $region34: #{tpu_custom_call.1} parent=1 // pred_check
      _
    $region35: #{tpu_custom_call.1} parent=1 // pred_check_branch
      %95 = sbr.rel (0) target = $region37
    $region36: #{tpu_custom_call.1} parent=1 // pred_region
      %s97 = ssub.s32 256, 256
      %98 = vsyncadd [#allocation12], %s97
      %s99 = sshll.u32 [#allocation13], 4
      %s100 = int_to_ptr.vmem [resolvable:$true] %s99
      %105 = dma.hbm_to_vmem [thread:$0]  %s8, 256, %s100, [#allocation12], 64, 64, 4
    $region37: #{tpu_custom_call.1} parent=1 // pred_fallthru
      _
    // Predicated region
    $region38: #{tpu_custom_call.1} parent=1 // pred_check
      _
    $region39: #{tpu_custom_call.1} parent=1 // pred_check_branch
      %107 = sbr.rel (0) target = $region41
    $region40: #{tpu_custom_call.1} parent=1 // pred_region
      %s109 = ssub.s32 2048, 2048
      %110 = vsyncadd [#allocation15], %s109
      %s111 = sshll.u32 [#allocation14], 4
      %s112 = int_to_ptr.vmem [resolvable:$true] %s111
      %117 = dma.hbm_to_vmem [thread:$0]  %s9, 2048, %s112, [#allocation15], 128, 128, 8
    $region41: #{tpu_custom_call.1} parent=1 // pred_fallthru
      _
    // Predicated region
    $region42: #{tpu_custom_call.1} parent=1 // pred_check
      _
    $region43: #{tpu_custom_call.1} parent=1 // pred_check_branch
      %119 = sbr.rel (0) target = $region45
    $region44: #{tpu_custom_call.1} parent=1 // pred_region
      _
    $region45: #{tpu_custom_call.1} parent=1 // pred_fallthru
      _
    // Predicated region
    $region46: #{tpu_custom_call.1} parent=1 // pred_check
      _
    $region47: #{tpu_custom_call.1} parent=1 // pred_check_branch
      %121 = sbr.rel (0) target = $region49
    $region48: #{tpu_custom_call.1} parent=1 // pred_region
      %122 = dma.done [#allocation3], 128
    $region49: #{tpu_custom_call.1} parent=1 // pred_fallthru
      _
    // Predicated region
    $region50: #{tpu_custom_call.1} parent=1 // pred_check
      _
    $region51: #{tpu_custom_call.1} parent=1 // pred_check_branch
      %124 = sbr.rel (0) target = $region53
    $region52: #{tpu_custom_call.1} parent=1 // pred_region
      %125 = dma.done [#allocation6], 256
    $region53: #{tpu_custom_call.1} parent=1 // pred_fallthru
      _
    // Predicated region
    $region54: #{tpu_custom_call.1} parent=1 // pred_check
      _
    $region55: #{tpu_custom_call.1} parent=1 // pred_check_branch
      %127 = sbr.rel (0) target = $region57
    $region56: #{tpu_custom_call.1} parent=1 // pred_region
      %128 = dma.done [#allocation6], 512
    $region57: #{tpu_custom_call.1} parent=1 // pred_fallthru
      _
    // Predicated region
    $region58: #{tpu_custom_call.1} parent=1 // pred_check
      _
    $region59: #{tpu_custom_call.1} parent=1 // pred_check_branch
      %130 = sbr.rel (0) target = $region61
    $region60: #{tpu_custom_call.1} parent=1 // pred_region
      %131 = dma.done [#allocation9], 16
    $region61: #{tpu_custom_call.1} parent=1 // pred_fallthru
      _
    // Predicated region
    $region62: #{tpu_custom_call.1} parent=1 // pred_check
      _
    $region63: #{tpu_custom_call.1} parent=1 // pred_check_branch
      %133 = sbr.rel (0) target = $region65
    $region64: #{tpu_custom_call.1} parent=1 // pred_region
      %134 = dma.done [#allocation9], 512
    $region65: #{tpu_custom_call.1} parent=1 // pred_fallthru
      _
    // Predicated region
    $region66: #{tpu_custom_call.1} parent=1 // pred_check
      _
    $region67: #{tpu_custom_call.1} parent=1 // pred_check_branch
      %136 = sbr.rel (0) target = $region69
    $region68: #{tpu_custom_call.1} parent=1 // pred_region
      %137 = dma.done [#allocation12], 16
    $region69: #{tpu_custom_call.1} parent=1 // pred_fallthru
      _
    // Predicated region
    $region70: #{tpu_custom_call.1} parent=1 // pred_check
      _
    $region71: #{tpu_custom_call.1} parent=1 // pred_check_branch
      %139 = sbr.rel (0) target = $region73
    $region72: #{tpu_custom_call.1} parent=1 // pred_region
      %140 = dma.done [#allocation12], 256
    $region73: #{tpu_custom_call.1} parent=1 // pred_fallthru
      _
    // Predicated region
    $region74: #{tpu_custom_call.1} parent=1 // pred_check
      _
    $region75: #{tpu_custom_call.1} parent=1 // pred_check_branch
      %142 = sbr.rel (0) target = $region77
    $region76: #{tpu_custom_call.1} parent=1 // pred_region
      %143 = dma.done [#allocation15], 2048
    $region77: #{tpu_custom_call.1} parent=1 // pred_fallthru
      _
    %v145 = vld [vmem:[#allocation2] sm:$0xf]
    %v146 = vld [vmem:[#allocation2 + $0x4] sm:$0xf]
    %v147 = vld [vmem:[#allocation5] sm:$0xf]
    %v148 = vld [vmem:[#allocation5 + $0x4] sm:$0xf]
    %v149 = vld [vmem:[#allocation5 + $0x8] sm:$0xf]
    %v150 = vld [vmem:[#allocation5 + $0xc] sm:$0xf]
    %v153 = vunpack.c.l.b16 %v145
    %v154 = vunpack.c.l.b16 %v146
    %v155 = vpack.c.b16 %v154, %v153
    %v160 = vunpack.c.l.b16 %v147
    %v161 = vunpack.c.l.b16 %v148
    %v162 = vunpack.c.l.b16 %v149
    %v163 = vunpack.c.l.b16 %v150
    %v164 = vpack.c.b16 %v161, %v160
    %v165 = vpack.c.b16 %v163, %v162
    %vm168 = vcmask 261120
    %v170 = vsel %vm168, %v155, 0
    %172 = vmatprep.subr.bf16.mxu0 0
    %173 = vmatpush1.bf16.msra.mxu0 0
    %174 = vmatprep.subr.bf16.mxu0 0
    %175 = vmatpush1.bf16.msra.mxu0 0
    %176 = vmatprep.subr.bf16.mxu0 0
    %177 = vmatpush1.bf16.msra.mxu0 0
    %178 = vmatprep.subr.bf16.mxu0 0
    %179 = vmatpush1.bf16.msra.mxu0 0
    %180 = vmatprep.subr.bf16.mxu0 0
    %181 = vmatpush1.bf16.msra.mxu0 0
    %182 = vmatprep.subr.bf16.mxu0 0
    %183 = vmatpush1.bf16.msra.mxu0 0
    %184 = vmatprep.subr.bf16.mxu0 0
    %185 = vmatpush1.bf16.msra.mxu0 %v165
    %186 = vmatprep.subr.bf16.mxu0 0
    %187 = vmatpush1.bf16.msra.mxu0 %v164
    %188 = vmatprep.subr.bf16.mxu0 0
    %189 = vmatpush2.bf16.msra.mxu0 0
    %190 = vmatprep.subr.bf16.mxu0 0
    %191 = vmatpush2.bf16.msra.mxu0 0
    %192 = vmatprep.subr.bf16.mxu0 0
    %193 = vmatpush2.bf16.msra.mxu0 0
    %194 = vmatprep.subr.bf16.mxu0 0
    %195 = vmatpush2.bf16.msra.mxu0 0
    %196 = vmatprep.subr.bf16.mxu0 0
    %197 = vmatpush2.bf16.msra.mxu0 0
    %198 = vmatprep.subr.bf16.mxu0 0
    %199 = vmatpush2.bf16.msra.mxu0 0
    %200 = vmatprep.subr.bf16.mxu0 0
    %201 = vmatpush2.bf16.msra.mxu0 0
    %202 = vmatprep.subr.bf16.mxu0 0
    %203 = vmatpush2.bf16.msra.mxu0 0
    %204 = vmatprep.mubr.bf16.mxu0 0
    %205 = vmatmul.mubr.bf16.gmra.mxu0 %v170
    %v206 = vpop.f32.mrf.mxu0
    %v207 = vadd.f32 0.0, %v206
    %v208 = vpop.f32.mrf.mxu0
    %v209 = vpop.f32.mrf.mxu0
    %v210 = vadd.f32 0.0, %v209
    %v211 = vpop.f32.mrf.mxu0
    %212 = vdwg.mxu0
    %vm213 = vcmask 523264
    %v214 = vsel %vm213, %v207, 0.0
    %215 = vadd.xlane.f32.xlu0 %v214
    %v216 = vpop.xlane.xlu0 %215
    %v217 = vsel %vm213, %v210, 0.0
    %218 = vadd.xlane.f32.xlu0 %v217
    %v219 = vpop.xlane.xlu0 %218
    %v220 = vmul.f32 %v207, %v207
    %v221 = vmul.f32 %v210, %v210
    %v222 = vsel %vm213, %v220, 0.0
    %223 = vadd.xlane.f32.xlu0 %v222
    %v224 = vpop.xlane.xlu0 %223
    %v225 = vsel %vm213, %v221, 0.0
    %226 = vadd.xlane.f32.xlu0 %v225
    %v227 = vpop.xlane.xlu0 %226
    %v228 = vmul.f32 %v216, 0.015625
    %v229 = vmul.f32 %v219, 0.015625
    %v230 = vmul.f32 %v224, 0.015625
    %v231 = vmul.f32 %v227, 0.015625
    %v232 = vmul.f32 %v228, %v228
    %v233 = vmul.f32 %v229, %v229
    %v234 = vsub.f32 %v230, %v232
    %v235 = vsub.f32 %v231, %v233
    %v236 = vsub.f32 %v207, %v228
    %v237 = vsub.f32 %v210, %v229
    %v238 = vadd.f32 %v234, 1e-05
    %v239 = vadd.f32 %v235, 1e-05
    %v240 = vrsqrt.pop %v238
    %v241 = vrsqrt.pop %v239
    %v242 = vmul.f32 %v236, %v240
    %v243 = vmul.f32 %v237, %v241
    %v244 = vld [vmem:[%s2] sm:$0x1]
    %v246 = vlaneseq
    %v247 = vshrl.u32 %v246, 7
    %v248 = vsub.s32 0, %v247
    %v249 = vrot.slane %v244, %v248
    %v251 = vmul.f32 %v242, %v249
    %v252 = vmul.f32 %v243, %v249
    %v253 = vld [vmem:[%s3] sm:$0x1]
    %v255 = vlaneseq
    %v256 = vshrl.u32 %v255, 7
    %v257 = vsub.s32 0, %v256
    %v258 = vrot.slane %v253, %v257
    %v260 = vadd.f32 %v251, %v258
    %v261 = vadd.f32 %v252, %v258
    %v262 = vpack.c.bf16 %v261, %v260
    %v263 = vld [vmem:[#allocation7] sm:$0xf]
    %v264 = vld [vmem:[#allocation7 + $0x4] sm:$0xf]
    %v265 = vld [vmem:[#allocation7 + $0x8] sm:$0xf]
    %v266 = vld [vmem:[#allocation7 + $0xc] sm:$0xf]
    %v267 = vld [vmem:[#allocation7 + $0x10] sm:$0xf]
    %v268 = vld [vmem:[#allocation7 + $0x14] sm:$0xf]
    %v269 = vld [vmem:[#allocation7 + $0x18] sm:$0xf]
    %v270 = vld [vmem:[#allocation7 + $0x1c] sm:$0xf]
    %v271 = vld [vmem:[#allocation8] sm:$0x1]
    %v273 = vlaneseq
    %v274 = vshrl.u32 %v273, 7
    %v275 = vsub.s32 0, %v274
    %v276 = vrot.slane %v271, %v275
    %v286 = vunpack.c.l.b16 %v263
    %v287 = vunpack.c.l.b16 %v264
    %v288 = vunpack.c.l.b16 %v265
    %v289 = vunpack.c.l.b16 %v266
    %v290 = vunpack.c.l.b16 %v267
    %v291 = vunpack.c.l.b16 %v268
    %v292 = vunpack.c.l.b16 %v269
    %v293 = vunpack.c.l.b16 %v270
    %v294 = vpack.c.b16 %v287, %v286
    %v295 = vpack.c.b16 %v289, %v288
    %v296 = vpack.c.b16 %v291, %v290
    %v297 = vpack.c.b16 %v293, %v292
    %v303 = vsel %vm213, %v262, 0
    %305 = vmatprep.subr.bf16.mxu0 0
    %306 = vmatpush1.bf16.msra.mxu0 0
    %307 = vmatprep.subr.bf16.mxu0 0
    %308 = vmatpush1.bf16.msra.mxu0 0
    %309 = vmatprep.subr.bf16.mxu0 0
    %310 = vmatpush1.bf16.msra.mxu0 0
    %311 = vmatprep.subr.bf16.mxu0 0
    %312 = vmatpush1.bf16.msra.mxu0 0
    %313 = vmatprep.subr.bf16.mxu0 0
    %314 = vmatpush1.bf16.msra.mxu0 %v297
    %315 = vmatprep.subr.bf16.mxu0 0
    %316 = vmatpush1.bf16.msra.mxu0 %v296
    %317 = vmatprep.subr.bf16.mxu0 0
    %318 = vmatpush1.bf16.msra.mxu0 %v295
    %319 = vmatprep.subr.bf16.mxu0 0
    %320 = vmatpush1.bf16.msra.mxu0 %v294
    %321 = vmatprep.subr.bf16.mxu0 0
    %322 = vmatpush2.bf16.msra.mxu0 0
    %323 = vmatprep.subr.bf16.mxu0 0
    %324 = vmatpush2.bf16.msra.mxu0 0
    %325 = vmatprep.subr.bf16.mxu0 0
    %326 = vmatpush2.bf16.msra.mxu0 0
    %327 = vmatprep.subr.bf16.mxu0 0
    %328 = vmatpush2.bf16.msra.mxu0 0
    %329 = vmatprep.subr.bf16.mxu0 0
    %330 = vmatpush2.bf16.msra.mxu0 0
    %331 = vmatprep.subr.bf16.mxu0 0
    %332 = vmatpush2.bf16.msra.mxu0 0
    %333 = vmatprep.subr.bf16.mxu0 0
    %334 = vmatpush2.bf16.msra.mxu0 0
    %335 = vmatprep.subr.bf16.mxu0 0
    %336 = vmatpush2.bf16.msra.mxu0 0
    %337 = vmatprep.mubr.bf16.mxu0 0
    %338 = vmatmul.mubr.bf16.gmra.mxu0 %v303
    %v339 = vpop.f32.mrf.mxu0
    %v340 = vadd.f32 %v276, %v339
    %v341 = vpop.f32.mrf.mxu0
    %v342 = vpop.f32.mrf.mxu0
    %v343 = vadd.f32 %v276, %v342
    %v344 = vpop.f32.mrf.mxu0
    %345 = vdwg.mxu0
    %v346 = vmul.f32 %v340, 0.5
    %v347 = vmul.f32 %v343, 0.5
    %v348 = vmul.f32 %v340, 0.70710677
    %v349 = vmul.f32 %v343, 0.70710677
    %v350 = verf.f32.pop %v348
    %v351 = verf.f32.pop %v349
    %v352 = vadd.f32 %v350, 1.0
    %v353 = vadd.f32 %v351, 1.0
    %v354 = vmul.f32 %v346, %v352
    %v355 = vmul.f32 %v347, %v353
    %v356 = vpack.c.bf16 %v355, %v354
    %v357 = vld [vmem:[#allocation10] sm:$0xf]
    %v358 = vld [vmem:[#allocation10 + $0x4] sm:$0xf]
    %v359 = vld [vmem:[#allocation10 + $0x8] sm:$0xf]
    %v360 = vld [vmem:[#allocation10 + $0xc] sm:$0xf]
    %v361 = vld [vmem:[#allocation10 + $0x10] sm:$0xf]
    %v362 = vld [vmem:[#allocation10 + $0x14] sm:$0xf]
    %v363 = vld [vmem:[#allocation10 + $0x18] sm:$0xf]
    %v364 = vld [vmem:[#allocation10 + $0x1c] sm:$0xf]
    %v365 = vld [vmem:[#allocation11] sm:$0x1]
    %v367 = vlaneseq
    %v368 = vshrl.u32 %v367, 7
    %v369 = vsub.s32 0, %v368
    %v370 = vrot.slane %v365, %v369
    %v380 = vunpack.c.l.b16 %v357
    %v381 = vunpack.c.l.b16 %v358
    %v382 = vunpack.c.l.b16 %v359
    %v383 = vunpack.c.l.b16 %v360
    %v384 = vunpack.c.l.b16 %v361
    %v385 = vunpack.c.l.b16 %v362
    %v386 = vunpack.c.l.b16 %v363
    %v387 = vunpack.c.l.b16 %v364
    %v388 = vpack.c.b16 %v381, %v380
    %v389 = vpack.c.b16 %v383, %v382
    %v390 = vpack.c.b16 %v385, %v384
    %v391 = vpack.c.b16 %v387, %v386
    %v397 = vsel %vm213, %v356, 0
    %399 = vmatprep.subr.bf16.mxu0 0
    %400 = vmatpush1.bf16.msra.mxu0 0
    %401 = vmatprep.subr.bf16.mxu0 0
    %402 = vmatpush1.bf16.msra.mxu0 0
    %403 = vmatprep.subr.bf16.mxu0 0
    %404 = vmatpush1.bf16.msra.mxu0 0
    %405 = vmatprep.subr.bf16.mxu0 0
    %406 = vmatpush1.bf16.msra.mxu0 0
    %407 = vmatprep.subr.bf16.mxu0 0
    %408 = vmatpush1.bf16.msra.mxu0 %v391
    %409 = vmatprep.subr.bf16.mxu0 0
    %410 = vmatpush1.bf16.msra.mxu0 %v390
    %411 = vmatprep.subr.bf16.mxu0 0
    %412 = vmatpush1.bf16.msra.mxu0 %v389
    %413 = vmatprep.subr.bf16.mxu0 0
    %414 = vmatpush1.bf16.msra.mxu0 %v388
    %415 = vmatprep.subr.bf16.mxu0 0
    %416 = vmatpush2.bf16.msra.mxu0 0
    %417 = vmatprep.subr.bf16.mxu0 0
    %418 = vmatpush2.bf16.msra.mxu0 0
    %419 = vmatprep.subr.bf16.mxu0 0
    %420 = vmatpush2.bf16.msra.mxu0 0
    %421 = vmatprep.subr.bf16.mxu0 0
    %422 = vmatpush2.bf16.msra.mxu0 0
    %423 = vmatprep.subr.bf16.mxu0 0
    %424 = vmatpush2.bf16.msra.mxu0 0
    %425 = vmatprep.subr.bf16.mxu0 0
    %426 = vmatpush2.bf16.msra.mxu0 0
    %427 = vmatprep.subr.bf16.mxu0 0
    %428 = vmatpush2.bf16.msra.mxu0 0
    %429 = vmatprep.subr.bf16.mxu0 0
    %430 = vmatpush2.bf16.msra.mxu0 0
    %431 = vmatprep.mubr.bf16.mxu0 0
    %432 = vmatmul.mubr.bf16.gmra.mxu0 %v397
    %v433 = vpop.f32.mrf.mxu0
    %v434 = vadd.f32 %v370, %v433
    %v435 = vpop.f32.mrf.mxu0
    %v436 = vpop.f32.mrf.mxu0
    %v437 = vadd.f32 %v370, %v436
    %v438 = vpop.f32.mrf.mxu0
    %439 = vdwg.mxu0
    %v440 = vadd.f32 %v260, %v434
    %v441 = vadd.f32 %v261, %v437
    %v442 = vpack.c.bf16 %v441, %v440
    %v443 = vld [vmem:[%s10] sm:$0xff]
    %v444 = vld [vmem:[%s10 + $0x8] sm:$0xff]
    %v445 = vld [vmem:[#allocation13] sm:$0xf]
    %v446 = vld [vmem:[#allocation13 + $0x4] sm:$0xf]
    %v449 = vunpack.c.l.b16 %v445
    %v450 = vunpack.c.l.b16 %v446
    %v451 = vpack.c.b16 %v450, %v449
    %vm452 = vcmask 130048
    %v454 = vsel %vm452, %v451, 0
    %456 = vmatprep.subr.bf16.mxu0 0
    %457 = vmatpush1.bf16.msra.mxu0 0
    %458 = vmatprep.subr.bf16.mxu0 0
    %459 = vmatpush1.bf16.msra.mxu0 0
    %460 = vmatprep.subr.bf16.mxu0 0
    %461 = vmatpush1.bf16.msra.mxu0 0
    %462 = vmatprep.subr.bf16.mxu0 0
    %463 = vmatpush1.bf16.msra.mxu0 0
    %464 = vmatprep.subr.bf16.mxu0 0
    %465 = vmatpush1.bf16.msra.mxu0 0
    %466 = vmatprep.subr.bf16.mxu0 0
    %467 = vmatpush1.bf16.msra.mxu0 0
    %468 = vmatprep.subr.bf16.mxu0 0
    %469 = vmatpush1.bf16.msra.mxu0 0
    %470 = vmatprep.subr.bf16.mxu0 0
    %471 = vmatpush1.bf16.msra.mxu0 %v442
    %472 = vmatprep.subr.bf16.mxu0 0
    %473 = vmatpush2.bf16.msra.mxu0 0
    %474 = vmatprep.subr.bf16.mxu0 0
    %475 = vmatpush2.bf16.msra.mxu0 0
    %476 = vmatprep.subr.bf16.mxu0 0
    %477 = vmatpush2.bf16.msra.mxu0 0
    %478 = vmatprep.subr.bf16.mxu0 0
    %479 = vmatpush2.bf16.msra.mxu0 0
    %480 = vmatprep.subr.bf16.mxu0 0
    %481 = vmatpush2.bf16.msra.mxu0 0
    %482 = vmatprep.subr.bf16.mxu0 0
    %483 = vmatpush2.bf16.msra.mxu0 0
    %484 = vmatprep.subr.bf16.mxu0 0
    %485 = vmatpush2.bf16.msra.mxu0 0
    %486 = vmatprep.subr.bf16.mxu0 0
    %487 = vmatpush2.bf16.msra.mxu0 0
    %488 = vmatprep.mubr.bf16.mxu0 0
    %489 = vmatmul.mubr.bf16.gmra.mxu0 %v454
    %v490 = vpop.f32.mrf.mxu0
    %v491 = vadd.f32 0.0, %v490
    %v492 = vpop.f32.mrf.mxu0
    %v493 = vpop.f32.mrf.mxu0
    %v494 = vadd.f32 0.0, %v493
    %v495 = vpop.f32.mrf.mxu0
    %496 = vdwg.mxu0
    %v497 = vld [vmem:[#allocation14] sm:$0xff]
    %v498 = vld [vmem:[#allocation14 + $0x8] sm:$0xff]
    %v499 = vld [vmem:[#allocation14 + $0x10] sm:$0xff]
    %v500 = vld [vmem:[#allocation14 + $0x18] sm:$0xff]
    %v501 = vld [vmem:[#allocation14 + $0x20] sm:$0xff]
    %v502 = vld [vmem:[#allocation14 + $0x28] sm:$0xff]
    %v503 = vld [vmem:[#allocation14 + $0x30] sm:$0xff]
    %v504 = vld [vmem:[#allocation14 + $0x38] sm:$0xff]
    %v506 = vsel %vm213, %v491, 0
    %v509 = vsel %vm213, %v494, 0
    %511 = vmatprep.subr.mxu0 0.0
    %512 = vmatpush1.msra.mxu0 0.0
    %513 = vmatprep.subr.mxu0 0.0
    %514 = vmatpush1.msra.mxu0 0.0
    %515 = vmatprep.subr.mxu0 0.0
    %516 = vmatpush1.msra.mxu0 0.0
    %517 = vmatprep.subr.mxu0 0.0
    %518 = vmatpush1.msra.mxu0 0.0
    %519 = vmatprep.subr.mxu0 0.0
    %520 = vmatpush1.msra.mxu0 0.0
    %521 = vmatprep.subr.mxu0 0.0
    %522 = vmatpush1.msra.mxu0 0.0
    %523 = vmatprep.subr.mxu0 0.0
    %524 = vmatpush1.msra.mxu0 0.0
    %525 = vmatprep.subr.mxu0 0.0
    %526 = vmatpush1.msra.mxu0 0.0
    %527 = vmatprep.subr.mxu0 0.0
    %528 = vmatpush1.msra.mxu0 %v504
    %529 = vmatprep.subr.mxu0 0.0
    %530 = vmatpush1.msra.mxu0 %v503
    %531 = vmatprep.subr.mxu0 0.0
    %532 = vmatpush1.msra.mxu0 %v502
    %533 = vmatprep.subr.mxu0 0.0
    %534 = vmatpush1.msra.mxu0 %v501
    %535 = vmatprep.subr.mxu0 0.0
    %536 = vmatpush1.msra.mxu0 %v500
    %537 = vmatprep.subr.mxu0 0.0
    %538 = vmatpush1.msra.mxu0 %v499
    %539 = vmatprep.subr.mxu0 0.0
    %540 = vmatpush1.msra.mxu0 %v498
    %541 = vmatprep.subr.mxu0 0.0
    %542 = vmatpush1.msra.mxu0 %v497
    %543 = vmatprep.subr.mxu0 0.0
    %544 = vmatpush2.msra.mxu0 0.0
    %545 = vmatprep.subr.mxu0 0.0
    %546 = vmatpush2.msra.mxu0 0.0
    %547 = vmatprep.subr.mxu0 0.0
    %548 = vmatpush2.msra.mxu0 0.0
    %549 = vmatprep.subr.mxu0 0.0
    %550 = vmatpush2.msra.mxu0 0.0
    %551 = vmatprep.subr.mxu0 0.0
    %552 = vmatpush2.msra.mxu0 0.0
    %553 = vmatprep.subr.mxu0 0.0
    %554 = vmatpush2.msra.mxu0 0.0
    %555 = vmatprep.subr.mxu0 0.0
    %556 = vmatpush2.msra.mxu0 0.0
    %557 = vmatprep.subr.mxu0 0.0
    %558 = vmatpush2.msra.mxu0 0.0
    %559 = vmatprep.subr.mxu0 0.0
    %560 = vmatpush2.msra.mxu0 0.0
    %561 = vmatprep.subr.mxu0 0.0
    %562 = vmatpush2.msra.mxu0 0.0
    %563 = vmatprep.subr.mxu0 0.0
    %564 = vmatpush2.msra.mxu0 0.0
    %565 = vmatprep.subr.mxu0 0.0
    %566 = vmatpush2.msra.mxu0 0.0
    %567 = vmatprep.subr.mxu0 0.0
    %568 = vmatpush2.msra.mxu0 0.0
    %569 = vmatprep.subr.mxu0 0.0
    %570 = vmatpush2.msra.mxu0 0.0
    %571 = vmatprep.subr.mxu0 0.0
    %572 = vmatpush2.msra.mxu0 0.0
    %573 = vmatprep.subr.mxu0 0.0
    %574 = vmatpush2.msra.mxu0 0.0
    %575 = vmatprep.mubr.f32.mxu0 0.0
    %576 = vmatmul.mubr.f32.gmra.mxu0 %v506
    %v577 = vpop.f32.mrf.mxu0
    %v578 = vadd.f32 0.0, %v577
    %v579 = vpop.f32.mrf.mxu0
    %580 = vmatprep.mubr.f32.mxu0 0.0
    %581 = vmatmul.mubr.f32.gmra.mxu0 %v509
    %v582 = vpop.f32.mrf.mxu0
    %v583 = vadd.f32 0.0, %v582
    %v584 = vpop.f32.mrf.mxu0
    %585 = vdwg.mxu0
    %v586 = vadd.f32 %v443, %v578
    %v587 = vadd.f32 %v444, %v583
    %s588 = scalar_lea.vmem [#allocation13], 8
    %v589 = vld [vmem:[%s588] sm:$0xf]
    %v590 = vld [vmem:[%s588 + $0x4] sm:$0xf]
    %v593 = vunpack.c.l.b16 %v589
    %v594 = vunpack.c.l.b16 %v590
    %v595 = vpack.c.b16 %v594, %v593
    %v597 = vsel %vm452, %v595, 0
    %599 = vmatprep.subr.bf16.mxu0 0
    %600 = vmatpush1.bf16.msra.mxu0 0
    %601 = vmatprep.subr.bf16.mxu0 0
    %602 = vmatpush1.bf16.msra.mxu0 0
    %603 = vmatprep.subr.bf16.mxu0 0
    %604 = vmatpush1.bf16.msra.mxu0 0
    %605 = vmatprep.subr.bf16.mxu0 0
    %606 = vmatpush1.bf16.msra.mxu0 0
    %607 = vmatprep.subr.bf16.mxu0 0
    %608 = vmatpush1.bf16.msra.mxu0 0
    %609 = vmatprep.subr.bf16.mxu0 0
    %610 = vmatpush1.bf16.msra.mxu0 0
    %611 = vmatprep.subr.bf16.mxu0 0
    %612 = vmatpush1.bf16.msra.mxu0 0
    %613 = vmatprep.subr.bf16.mxu0 0
    %614 = vmatpush1.bf16.msra.mxu0 %v442
    %615 = vmatprep.subr.bf16.mxu0 0
    %616 = vmatpush2.bf16.msra.mxu0 0
    %617 = vmatprep.subr.bf16.mxu0 0
    %618 = vmatpush2.bf16.msra.mxu0 0
    %619 = vmatprep.subr.bf16.mxu0 0
    %620 = vmatpush2.bf16.msra.mxu0 0
    %621 = vmatprep.subr.bf16.mxu0 0
    %622 = vmatpush2.bf16.msra.mxu0 0
    %623 = vmatprep.subr.bf16.mxu0 0
    %624 = vmatpush2.bf16.msra.mxu0 0
    %625 = vmatprep.subr.bf16.mxu0 0
    %626 = vmatpush2.bf16.msra.mxu0 0
    %627 = vmatprep.subr.bf16.mxu0 0
    %628 = vmatpush2.bf16.msra.mxu0 0
    %629 = vmatprep.subr.bf16.mxu0 0
    %630 = vmatpush2.bf16.msra.mxu0 0
    %631 = vmatprep.mubr.bf16.mxu0 0
    %632 = vmatmul.mubr.bf16.gmra.mxu0 %v597
    %v633 = vpop.f32.mrf.mxu0
    %v634 = vadd.f32 0.0, %v633
    %v635 = vpop.f32.mrf.mxu0
    %v636 = vpop.f32.mrf.mxu0
    %v637 = vadd.f32 0.0, %v636
    %v638 = vpop.f32.mrf.mxu0
    %639 = vdwg.mxu0
    %s640 = scalar_lea.vmem [#allocation14], 64
    %v641 = vld [vmem:[%s640] sm:$0xff]
    %v642 = vld [vmem:[%s640 + $0x8] sm:$0xff]
    %v643 = vld [vmem:[%s640 + $0x10] sm:$0xff]
    %v644 = vld [vmem:[%s640 + $0x18] sm:$0xff]
    %v645 = vld [vmem:[%s640 + $0x20] sm:$0xff]
    %v646 = vld [vmem:[%s640 + $0x28] sm:$0xff]
    %v647 = vld [vmem:[%s640 + $0x30] sm:$0xff]
    %v648 = vld [vmem:[%s640 + $0x38] sm:$0xff]
    %v650 = vsel %vm213, %v634, 0
    %v653 = vsel %vm213, %v637, 0
    %655 = vmatprep.subr.mxu0 0.0
    %656 = vmatpush1.msra.mxu0 0.0
    %657 = vmatprep.subr.mxu0 0.0
    %658 = vmatpush1.msra.mxu0 0.0
    %659 = vmatprep.subr.mxu0 0.0
    %660 = vmatpush1.msra.mxu0 0.0
    %661 = vmatprep.subr.mxu0 0.0
    %662 = vmatpush1.msra.mxu0 0.0
    %663 = vmatprep.subr.mxu0 0.0
    %664 = vmatpush1.msra.mxu0 0.0
    %665 = vmatprep.subr.mxu0 0.0
    %666 = vmatpush1.msra.mxu0 0.0
    %667 = vmatprep.subr.mxu0 0.0
    %668 = vmatpush1.msra.mxu0 0.0
    %669 = vmatprep.subr.mxu0 0.0
    %670 = vmatpush1.msra.mxu0 0.0
    %671 = vmatprep.subr.mxu0 0.0
    %672 = vmatpush1.msra.mxu0 %v648
    %673 = vmatprep.subr.mxu0 0.0
    %674 = vmatpush1.msra.mxu0 %v647
    %675 = vmatprep.subr.mxu0 0.0
    %676 = vmatpush1.msra.mxu0 %v646
    %677 = vmatprep.subr.mxu0 0.0
    %678 = vmatpush1.msra.mxu0 %v645
    %679 = vmatprep.subr.mxu0 0.0
    %680 = vmatpush1.msra.mxu0 %v644
    %681 = vmatprep.subr.mxu0 0.0
    %682 = vmatpush1.msra.mxu0 %v643
    %683 = vmatprep.subr.mxu0 0.0
    %684 = vmatpush1.msra.mxu0 %v642
    %685 = vmatprep.subr.mxu0 0.0
    %686 = vmatpush1.msra.mxu0 %v641
    %687 = vmatprep.subr.mxu0 0.0
    %688 = vmatpush2.msra.mxu0 0.0
    %689 = vmatprep.subr.mxu0 0.0
    %690 = vmatpush2.msra.mxu0 0.0
    %691 = vmatprep.subr.mxu0 0.0
    %692 = vmatpush2.msra.mxu0 0.0
    %693 = vmatprep.subr.mxu0 0.0
    %694 = vmatpush2.msra.mxu0 0.0
    %695 = vmatprep.subr.mxu0 0.0
    %696 = vmatpush2.msra.mxu0 0.0
    %697 = vmatprep.subr.mxu0 0.0
    %698 = vmatpush2.msra.mxu0 0.0
    %699 = vmatprep.subr.mxu0 0.0
    %700 = vmatpush2.msra.mxu0 0.0
    %701 = vmatprep.subr.mxu0 0.0
    %702 = vmatpush2.msra.mxu0 0.0
    %703 = vmatprep.subr.mxu0 0.0
    %704 = vmatpush2.msra.mxu0 0.0
    %705 = vmatprep.subr.mxu0 0.0
    %706 = vmatpush2.msra.mxu0 0.0
    %707 = vmatprep.subr.mxu0 0.0
    %708 = vmatpush2.msra.mxu0 0.0
    %709 = vmatprep.subr.mxu0 0.0
    %710 = vmatpush2.msra.mxu0 0.0
    %711 = vmatprep.subr.mxu0 0.0
    %712 = vmatpush2.msra.mxu0 0.0
    %713 = vmatprep.subr.mxu0 0.0
    %714 = vmatpush2.msra.mxu0 0.0
    %715 = vmatprep.subr.mxu0 0.0
    %716 = vmatpush2.msra.mxu0 0.0
    %717 = vmatprep.subr.mxu0 0.0
    %718 = vmatpush2.msra.mxu0 0.0
    %719 = vmatprep.mubr.f32.mxu0 0.0
    %720 = vmatmul.mubr.f32.gmra.mxu0 %v650
    %v721 = vpop.f32.mrf.mxu0
    %v722 = vadd.f32 0.0, %v721
    %v723 = vpop.f32.mrf.mxu0
    %724 = vmatprep.mubr.f32.mxu0 0.0
    %725 = vmatmul.mubr.f32.gmra.mxu0 %v653
    %v726 = vpop.f32.mrf.mxu0
    %v727 = vadd.f32 0.0, %v726
    %v728 = vpop.f32.mrf.mxu0
    %729 = vdwg.mxu0
    %v730 = vadd.f32 %v586, %v722
    %v731 = vadd.f32 %v587, %v727
    %732 = vst [vmem:[#allocation16] sm:$0xff] %v730
    %733 = vst [vmem:[#allocation16 + $0x8] sm:$0xff] %v731
    // Predicated region
    $region78: #{tpu_custom_call.1} parent=1 // pred_check
      _
    $region79: #{tpu_custom_call.1} parent=1 // pred_check_branch
      %735 = sbr.rel (0) target = $region81
    $region80: #{tpu_custom_call.1} parent=1 // pred_region
      %s737 = ssub.s32 256, 256
      %738 = vsyncadd [#allocation4], %s737
      %s739 = sshll.u32 [#allocation16], 4
      %s740 = int_to_ptr.vmem [resolvable:$true] %s739
      %745 = dma.vmem_to_hbm [thread:$0]  %s740, 256, %s11, [#allocation4], 128, 128, 8
    $region81: #{tpu_custom_call.1} parent=1 // pred_fallthru
      _
    // Predicated region
    $region82: #{tpu_custom_call.1} parent=1 // pred_check
      _
    $region83: #{tpu_custom_call.1} parent=1 // pred_check_branch
      %747 = sbr.rel (0) target = $region85
    $region84: #{tpu_custom_call.1} parent=1 // pred_region
      %748 = dma.done [#allocation4], 256
    $region85: #{tpu_custom_call.1} parent=1 // pred_fallthru
      _
    %749 = vsyncpa [#allocation3], 1
    %750 = vsyncpa [#allocation6], 1
    %751 = vsyncpa [#allocation9], 1
    %752 = vsyncpa [#allocation12], 1
    %753 = vsyncpa [#allocation15], 1
    %754 = vsyncpa [#allocation4], 1

</llo_original>
